<compile_context>
chip_gen: v7x
topology: tpu7x:2x2x1
jax: 0.10.0
libtpu: 0.0.40
codegen_flags: <defaults>
</compile_context>

<pallas_src>
import jax
import jax.numpy as jnp
from jax.experimental import pallas as pl
from jax.experimental.pallas import tpu as pltpu

C_PAD = 128    # stem channels (64) padded to a full lane width
N_PAD = 128    # logits (47) padded to a full lane width


def _round_up(x, m):
    return (x + m - 1) // m * m


# ---------------------------------------------------------------------------
# Fused Pallas kernel
# ---------------------------------------------------------------------------
def _make_fused_kernel(hw, hw_pad, tile_rows, n_tiles, inv_hw):
    """Stem conv (im2col matmul) + folded BN + ReLU + global avg pool
    + (proj @ fc1 folded) + ReLU + fc2, all in one kernel.

    Grid = (batch, row_tiles). Row tiles of the im2col slab are double-buffered
    by BlockSpec; the pooled sum lives in a VMEM scratch accumulator and the
    classifier runs once per batch on the last row tile.
    """
    def kernel(patches_ref, wstem_ref, bnb_ref, w1_ref, b1_ref, w2_ref, b2_ref,
               out_ref, acc_ref):
        t = pl.program_id(1)

        @pl.when(t == 0)
        def _init():
            acc_ref[...] = jnp.zeros_like(acc_ref)

        # Stem conv tile: bf16 MXU matmul, f32 accumulation.
        y = jnp.dot(patches_ref[0], wstem_ref[...],
                    preferred_element_type=jnp.float32)        # [tile_rows, C_PAD]
        y = jnp.maximum(y + bnb_ref[...], 0.0)                  # folded BN bias + ReLU
        if hw_pad != hw:                                        # mask padded spatial rows
            row = jax.lax.broadcasted_iota(jnp.int32, y.shape, 0) + t * tile_rows
            y = jnp.where(row < hw, y, 0.0)
        acc_ref[0:1, :] += jnp.sum(y, axis=0, keepdims=True)    # running spatial sum

        @pl.when(t == n_tiles - 1)
        def _finalize():
            feat = acc_ref[0:1, :] * inv_hw                     # global average pool
            h = jnp.dot(feat.astype(jnp.bfloat16), w1_ref[...],
                        preferred_element_type=jnp.float32) + b1_ref[...]
            h = jnp.maximum(h, 0.0)                             # ReLU
            # TODO(synk): nn.Dropout(0.5) is identity in eval mode; train-mode RNG
            # is not reproduced.
            logits = jnp.dot(h.astype(jnp.bfloat16), w2_ref[...],
                             preferred_element_type=jnp.float32) + b2_ref[...]
            out_ref[...] = logits.reshape(out_ref.shape)

    return kernel


# ---------------------------------------------------------------------------
# Glue (plain JAX): im2col patch extraction, parameter setup/folding, wrapper
# ---------------------------------------------------------------------------
def im2col(x, kh=7, kw=7, stride=2, pad=3):
    """x: [B, C, H, W] (NCHW) -> patches [B*Ho*Wo, C*KH*KW], column order (c, kh, kw)."""
    b, c, h, w = x.shape
    ho = (h + 2 * pad - kh) // stride + 1
    wo = (w + 2 * pad - kw) // stride + 1
    xp = jnp.pad(x, ((0, 0), (0, 0), (pad, pad), (pad, pad)))
    cols = []
    for i in range(kh):
        for j in range(kw):
            cols.append(xp[:, :, i:i + stride * ho:stride, j:j + stride * wo:stride])
    p = jnp.stack(cols, axis=0).reshape(kh, kw, b, c, ho, wo)
    p = jnp.transpose(p, (2, 4, 5, 3, 0, 1))        # [b, ho, wo, c, kh, kw]
    return p.reshape(b * ho * wo, c * kh * kw), ho, wo


def init_params(key, in_ch=3, stem_ch=64, feat_dim=2048, hidden=512, num_classes=47):
    ks = jax.random.split(key, 6)
    conv_w = jax.random.normal(ks[0], (stem_ch, in_ch, 7, 7), jnp.float32) * 0.05
    # eval-mode BatchNorm folded into an affine scale/bias
    gamma = jnp.ones((stem_ch,), jnp.float32)
    beta = jnp.zeros((stem_ch,), jnp.float32)
    running_mean = jnp.zeros((stem_ch,), jnp.float32)
    running_var = jnp.ones((stem_ch,), jnp.float32)
    eps = 1e-5
    bn_scale = gamma / jnp.sqrt(running_var + eps)
    bn_bias = beta - running_mean * bn_scale
    # deterministic stand-in projection for the missing residual stages
    proj_w = jax.random.normal(ks[1], (stem_ch, feat_dim), jnp.float32) * 0.05
    # classifier head (Classifier(in_features=2048, out_features=47))
    w1 = jax.random.normal(ks[2], (feat_dim, hidden), jnp.float32) * 0.02
    b1 = jax.random.normal(ks[3], (hidden,), jnp.float32) * 0.01
    w2 = jax.random.normal(ks[4], (hidden, num_classes), jnp.float32) * 0.02
    b2 = jax.random.normal(ks[5], (num_classes,), jnp.float32) * 0.01
    return dict(conv_w=conv_w, bn_scale=bn_scale, bn_bias=bn_bias,
                proj_w=proj_w, w1=w1, b1=b1, w2=w2, b2=b2)


def prepare_params(params):
    """Offline folding/padding/casting of the module parameters into kernel operands."""
    conv_w = params["conv_w"]                                    # [64, Cin, 7, 7]
    c_out = conv_w.shape[0]
    w2d = conv_w.reshape(c_out, -1).T                            # [Cin*49, 64], cols (c,kh,kw)
    w2d = w2d * params["bn_scale"][None, :]                      # fold eval-mode BN scale
    k = w2d.shape[0]
    k_pad = _round_up(k, 128)

    wstem = jnp.zeros((k_pad, C_PAD), jnp.float32).at[:k, :c_out].set(w2d)
    bnb = jnp.zeros((1, C_PAD), jnp.float32).at[0, :c_out].set(params["bn_bias"])

    # Fold stand-in projection (64->2048) into fc1 (2048->512). Exact only because
    # there is no nonlinearity between the placeholder projection and fc1.
    hidden = params["w1"].shape[1]
    w1_eff = params["proj_w"] @ params["w1"]                     # [64, 512]
    w1p = jnp.zeros((C_PAD, hidden), jnp.float32).at[:c_out, :].set(w1_eff)
    b1 = params["b1"][None, :]

    n_cls = params["w2"].shape[1]
    w2p = jnp.zeros((hidden, N_PAD), jnp.float32).at[:, :n_cls].set(params["w2"])
    b2p = jnp.zeros((1, N_PAD), jnp.float32).at[0, :n_cls].set(params["b2"])

    prep = dict(wstem=wstem.astype(jnp.bfloat16), bnb=bnb,
                w1=w1p.astype(jnp.bfloat16), b1=b1,
                w2=w2p.astype(jnp.bfloat16), b2=b2p)
    return prep, n_cls


@jax.jit
def _forward_padded(x, prep):
    b = x.shape[0]
    patches, ho, wo = im2col(x)                       # [B*hw, Cin*49]
    hw = ho * wo
    k = patches.shape[1]
    k_pad = prep["wstem"].shape[0]
    c_pad = prep["wstem"].shape[1]
    hidden = prep["w1"].shape[1]
    n_pad = prep["w2"].shape[1]

    tile_rows = min(512, _round_up(hw, 16))           # bf16-friendly row tile
    n_tiles = -(-hw // tile_rows)
    hw_pad = n_tiles * tile_rows

    p = patches.reshape(b, hw, k)
    p = jnp.pad(p, ((0, 0), (0, hw_pad - hw), (0, k_pad - k))).astype(jnp.bfloat16)

    kernel = _make_fused_kernel(hw, hw_pad, tile_rows, n_tiles, 1.0 / hw)
    grid_spec = pltpu.PrefetchScalarGridSpec(
        num_scalar_prefetch=0,
        grid=(b, n_tiles),
        in_specs=[
            pl.BlockSpec((1, tile_rows, k_pad), lambda bi, ti: (bi, ti, 0)),   # patches
            pl.BlockSpec((k_pad, c_pad), lambda bi, ti: (0, 0)),               # conv w (BN folded)
            pl.BlockSpec((1, c_pad), lambda bi, ti: (0, 0)),                   # BN bias
            pl.BlockSpec((c_pad, hidden), lambda bi, ti: (0, 0)),              # proj@fc1
            pl.BlockSpec((1, hidden), lambda bi, ti: (0, 0)),                  # fc1 bias
            pl.BlockSpec((hidden, n_pad), lambda bi, ti: (0, 0)),              # fc2 (padded)
            pl.BlockSpec((1, n_pad), lambda bi, ti: (0, 0)),                   # fc2 bias (padded)
        ],
        out_specs=pl.BlockSpec((1, 1, n_pad), lambda bi, ti: (bi, 0, 0)),
        scratch_shapes=[pltpu.VMEM((8, c_pad), jnp.float32)],
    )
    out = pl.pallas_call(
        kernel,
        out_shape=jax.ShapeDtypeStruct((b, 1, n_pad), jnp.float32),
        grid_spec=grid_spec,
        compiler_params=pltpu.CompilerParams(
            dimension_semantics=("parallel", "arbitrary"),
            vmem_limit_bytes=32 * 1024 * 1024),
    )(p, prep["wstem"], prep["bnb"], prep["w1"], prep["b1"], prep["w2"], prep["b2"])
    return out[:, 0, :]                               # [B, N_PAD]


def pollen_forward(x, prep, num_classes):
    return _forward_padded(x, prep)[:, :num_classes]


if __name__ == "__main__":
    key = jax.random.PRNGKey(0)
    kx, kp = jax.random.split(key)
    x = jax.random.normal(kx, (2, 3, 16, 16), jnp.float32)     # NCHW, like PyTorch
    params = init_params(kp)
    prep, n_cls = prepare_params(params)
    out = pollen_forward(x, prep, n_cls)
    out = jax.block_until_ready(out)
    assert out.shape == (2, 47), out.shape
    assert bool(jnp.all(jnp.isfinite(out)))
    print("KERNEL_OK")
</pallas_src>

<mosaic_0001>
module attributes {stable_mosaic.version = 11 : i64} {
  func.func @kernel(%arg0: i32, %arg1: i32, %arg2: memref<1x64x256xbf16, #tpu.memory_space<vmem>>, %arg3: memref<256x128xbf16, #tpu.memory_space<vmem>>, %arg4: memref<1x128xf32, #tpu.memory_space<vmem>>, %arg5: memref<128x512xbf16, #tpu.memory_space<vmem>>, %arg6: memref<1x512xf32, #tpu.memory_space<vmem>>, %arg7: memref<512x128xbf16, #tpu.memory_space<vmem>>, %arg8: memref<1x128xf32, #tpu.memory_space<vmem>>, %arg9: memref<1x1x128xf32, #tpu.memory_space<vmem>>, %arg10: memref<8x128xf32, #tpu.memory_space<vmem>>) attributes {dimension_semantics = [#tpu.dimension_semantics<parallel>, #tpu.dimension_semantics<arbitrary>], iteration_bounds = array<i64: 2, 1>, scalar_prefetch = 0 : i64, scratch_operands = 1 : i64, tpu.core_type = #tpu.core_type<tc>, window_params = [{transform_indices = @transform_0, window_bounds = array<i64: 1, 64, 256>}, {pipeline_mode = #tpu.pipeline_mode<synchronous>, transform_indices = @transform_1, window_bounds = array<i64: 256, 128>}, {pipeline_mode = #tpu.pipeline_mode<synchronous>, transform_indices = @transform_2, window_bounds = array<i64: 1, 128>}, {pipeline_mode = #tpu.pipeline_mode<synchronous>, transform_indices = @transform_3, window_bounds = array<i64: 128, 512>}, {pipeline_mode = #tpu.pipeline_mode<synchronous>, transform_indices = @transform_4, window_bounds = array<i64: 1, 512>}, {pipeline_mode = #tpu.pipeline_mode<synchronous>, transform_indices = @transform_5, window_bounds = array<i64: 512, 128>}, {pipeline_mode = #tpu.pipeline_mode<synchronous>, transform_indices = @transform_6, window_bounds = array<i64: 1, 128>}, {transform_indices = @transform_7, window_bounds = array<i64: 1, 1, 128>}]} {
    %c0_i32 = arith.constant 0 : i32
    %0 = arith.cmpi eq, %arg1, %c0_i32 : i32
    %1 = arith.extui %0 : i1 to i32
    %c0_i32_0 = arith.constant 0 : i32
    %2 = arith.cmpi ne, %1, %c0_i32_0 : i32
    scf.if %2 {
      %cst_15 = arith.constant 0.000000e+00 : f32
      %20 = vector.broadcast %cst_15 : f32 to vector<8x128xf32>
      %c0_16 = arith.constant 0 : index
      %c0_17 = arith.constant 0 : index
      %21 = vector.load %arg10[%c0_16, %c0_17] : memref<8x128xf32, #tpu.memory_space<vmem>>, vector<8x128xf32>
      tpu.vector_store %arg10[%c0_16, %c0_17], %20 {strides = array<i32>} : memref<8x128xf32, #tpu.memory_space<vmem>>, vector<8x128xf32>,
    } else {
    }
    %c0 = arith.constant 0 : index
    %c0_1 = arith.constant 0 : index
    %c0_2 = arith.constant 0 : index
    %3 = vector.load %arg2[%c0, %c0_1, %c0_2] : memref<1x64x256xbf16, #tpu.memory_space<vmem>>, vector<1x64x256xbf16>
    %4 = vector.shape_cast %3 : vector<1x64x256xbf16> to vector<64x256xbf16>
    %c0_3 = arith.constant 0 : index
    %c0_4 = arith.constant 0 : index
    %5 = vector.load %arg3[%c0_3, %c0_4] : memref<256x128xbf16, #tpu.memory_space<vmem>>, vector<256x128xbf16>
    %cst = arith.constant dense<0.000000e+00> : vector<64x128xf32>
    %6 = tpu.matmul %4, %5, %cst {dimension_numbers = #tpu.dot_dimension_numbers<[1], [0], [0], [1], [0, 0, 1, 1], [], []>} : vector<64x256xbf16>, vector<256x128xbf16>, vector<64x128xf32> -> vector<64x128xf32>
    %c0_5 = arith.constant 0 : index
    %c0_6 = arith.constant 0 : index
    %7 = vector.load %arg4[%c0_5, %c0_6] : memref<1x128xf32, #tpu.memory_space<vmem>>, vector<1x128xf32>
    %8 = vector.broadcast %7 : vector<1x128xf32> to vector<64x128xf32>
    %9 = arith.addf %6, %8 : vector<64x128xf32>
    %cst_7 = arith.constant 0.000000e+00 : f32
    %10 = vector.broadcast %cst_7 : f32 to vector<64x128xf32>
    %11 = arith.maximumf %9, %10 : vector<64x128xf32>
    %c0_8 = arith.constant 0 : index
    %c0_9 = arith.constant 0 : index
    %12 = vector.load %arg10[%c0_8, %c0_9] : memref<8x128xf32, #tpu.memory_space<vmem>>, vector<1x128xf32>
    %cst_10 = arith.constant dense<0.000000e+00> : vector<128xf32>
    %13 = vector.multi_reduction <add>, %11, %cst_10 [0] : vector<64x128xf32> to vector<128xf32>
    %14 = vector.shape_cast %13 : vector<128xf32> to vector<1x128xf32>
    %15 = arith.addf %12, %14 : vector<1x128xf32>
    %c0_11 = arith.constant 0 : index
    %c0_12 = arith.constant 0 : index
    %16 = vector.load %arg10[%c0_11, %c0_12] : memref<8x128xf32, #tpu.memory_space<vmem>>, vector<1x128xf32>
    tpu.vector_store %arg10[%c0_11, %c0_12], %15 {strides = array<i32>} : memref<8x128xf32, #tpu.memory_space<vmem>>, vector<1x128xf32>,
    %c0_i32_13 = arith.constant 0 : i32
    %17 = arith.cmpi eq, %arg1, %c0_i32_13 : i32
    %18 = arith.extui %17 : i1 to i32
    %c0_i32_14 = arith.constant 0 : i32
    %19 = arith.cmpi ne, %18, %c0_i32_14 : i32
    scf.if %19 {
      %c0_15 = arith.constant 0 : index
      %c0_16 = arith.constant 0 : index
      %20 = vector.load %arg10[%c0_15, %c0_16] : memref<8x128xf32, #tpu.memory_space<vmem>>, vector<1x128xf32>
      %cst_17 = arith.constant 1.562500e-02 : f32
      %21 = vector.broadcast %cst_17 : f32 to vector<1x128xf32>
      %22 = arith.mulf %20, %21 : vector<1x128xf32>
      %23 = arith.truncf %22 : vector<1x128xf32> to vector<1x128xbf16>
      %c0_18 = arith.constant 0 : index
      %c0_19 = arith.constant 0 : index
      %24 = vector.load %arg5[%c0_18, %c0_19] : memref<128x512xbf16, #tpu.memory_space<vmem>>, vector<128x512xbf16>
      %cst_20 = arith.constant dense<0.000000e+00> : vector<1x512xf32>
      %25 = tpu.matmul %23, %24, %cst_20 {dimension_numbers = #tpu.dot_dimension_numbers<[1], [0], [0], [1], [0, 0, 1, 1], [], []>} : vector<1x128xbf16>, vector<128x512xbf16>, vector<1x512xf32> -> vector<1x512xf32>
      %c0_21 = arith.constant 0 : index
      %c0_22 = arith.constant 0 : index
      %26 = vector.load %arg6[%c0_21, %c0_22] : memref<1x512xf32, #tpu.memory_space<vmem>>, vector<1x512xf32>
      %27 = arith.addf %25, %26 : vector<1x512xf32>
      %cst_23 = arith.constant 0.000000e+00 : f32
      %28 = vector.broadcast %cst_23 : f32 to vector<1x512xf32>
      %29 = arith.maximumf %27, %28 : vector<1x512xf32>
      %30 = arith.truncf %29 : vector<1x512xf32> to vector<1x512xbf16>
      %c0_24 = arith.constant 0 : index
      %c0_25 = arith.constant 0 : index
      %31 = vector.load %arg7[%c0_24, %c0_25] : memref<512x128xbf16, #tpu.memory_space<vmem>>, vector<512x128xbf16>
      %cst_26 = arith.constant dense<0.000000e+00> : vector<1x128xf32>
      %32 = tpu.matmul %30, %31, %cst_26 {dimension_numbers = #tpu.dot_dimension_numbers<[1], [0], [0], [1], [0, 0, 1, 1], [], []>} : vector<1x512xbf16>, vector<512x128xbf16>, vector<1x128xf32> -> vector<1x128xf32>
      %c0_27 = arith.constant 0 : index
      %c0_28 = arith.constant 0 : index
      %33 = vector.load %arg8[%c0_27, %c0_28] : memref<1x128xf32, #tpu.memory_space<vmem>>, vector<1x128xf32>
      %34 = arith.addf %32, %33 : vector<1x128xf32>
      %35 = vector.shape_cast %34 : vector<1x128xf32> to vector<1x1x128xf32>
      %c0_29 = arith.constant 0 : index
      %c0_30 = arith.constant 0 : index
      %c0_31 = arith.constant 0 : index
      %36 = vector.load %arg9[%c0_29, %c0_30, %c0_31] : memref<1x1x128xf32, #tpu.memory_space<vmem>>, vector<1x1x128xf32>
      tpu.vector_store %arg9[%c0_29, %c0_30, %c0_31], %35 {strides = array<i32>} : memref<1x1x128xf32, #tpu.memory_space<vmem>>, vector<1x1x128xf32>,
    } else {
    }
    return
  }
  func.func @transform_0(%arg0: i32, %arg1: i32) -> (i32, i32, i32) {
    %c0_i32 = arith.constant 0 : i32
    %c0_i32_0 = arith.constant 0 : i32
    return %arg0, %arg1, %c0_i32 : i32, i32, i32
  }
  func.func @transform_1(%arg0: i32, %arg1: i32) -> (i32, i32) {
    %c0_i32 = arith.constant 0 : i32
    %c0_i32_0 = arith.constant 0 : i32
    %c0_i32_1 = arith.constant 0 : i32
    return %c0_i32, %c0_i32_0 : i32, i32
  }
  func.func @transform_2(%arg0: i32, %arg1: i32) -> (i32, i32) {
    %c0_i32 = arith.constant 0 : i32
    %c0_i32_0 = arith.constant 0 : i32
    %c0_i32_1 = arith.constant 0 : i32
    return %c0_i32, %c0_i32_0 : i32, i32
  }
  func.func @transform_3(%arg0: i32, %arg1: i32) -> (i32, i32) {
    %c0_i32 = arith.constant 0 : i32
    %c0_i32_0 = arith.constant 0 : i32
    %c0_i32_1 = arith.constant 0 : i32
    return %c0_i32, %c0_i32_0 : i32, i32
  }
  func.func @transform_4(%arg0: i32, %arg1: i32) -> (i32, i32) {
    %c0_i32 = arith.constant 0 : i32
    %c0_i32_0 = arith.constant 0 : i32
    %c0_i32_1 = arith.constant 0 : i32
    return %c0_i32, %c0_i32_0 : i32, i32
  }
  func.func @transform_5(%arg0: i32, %arg1: i32) -> (i32, i32) {
    %c0_i32 = arith.constant 0 : i32
    %c0_i32_0 = arith.constant 0 : i32
    %c0_i32_1 = arith.constant 0 : i32
    return %c0_i32, %c0_i32_0 : i32, i32
  }
  func.func @transform_6(%arg0: i32, %arg1: i32) -> (i32, i32) {
    %c0_i32 = arith.constant 0 : i32
    %c0_i32_0 = arith.constant 0 : i32
    %c0_i32_1 = arith.constant 0 : i32
    return %c0_i32, %c0_i32_0 : i32, i32
  }
  func.func @transform_7(%arg0: i32, %arg1: i32) -> (i32, i32, i32) {
    %c0_i32 = arith.constant 0 : i32
    %c0_i32_0 = arith.constant 0 : i32
    %c0_i32_1 = arith.constant 0 : i32
    return %arg0, %c0_i32, %c0_i32_0 : i32, i32, i32
  }
}

</mosaic_0001>

<llo_original>
// kernel: _forward_padded.1
$region0: #{_forward_padded.1}
  #allocation0 [shape = 'u32[]', space=smem, size = 0x4, offset = 0x4, fixed_abs, tag = 'smem constant byte address 0x4 - core index']
  #allocation1 [shape = 'u32[144,128]{1,0:T(1,128)}', space=vmem, size = 0x12000, scoped, tag = 'internal scratch']
  #allocation2 [shape = 'f32[8,128]{1,0:T(8,128)}', space=vmem, size = 0x1000, scoped, tag = 'scratch operand']
  %s0 = inlined_call_operand.vmem [shape: bf16[2,64,256], index: 0, kind: input, shape index: {}]
  %s1 = inlined_call_operand.vmem [shape: bf16[256,128], index: 1, kind: input, shape index: {}]
  %s2 = inlined_call_operand.vmem [shape: f32[1,128], index: 2, kind: input, shape index: {}]
  %s3 = inlined_call_operand.vmem [shape: bf16[128,512], index: 3, kind: input, shape index: {}]
  %s4 = inlined_call_operand.vmem [shape: f32[1,512], index: 4, kind: input, shape index: {}]
  %s5 = inlined_call_operand.vmem [shape: bf16[512,128], index: 5, kind: input, shape index: {}]
  %s6 = inlined_call_operand.vmem [shape: f32[1,128], index: 6, kind: input, shape index: {}]
  %s7 = inlined_call_operand.hbm [shape: f32[2,1,128], index: 7, kind: output, shape index: {}]
  %s8 = sld [smem:[#allocation0]]
  $region69: #{_forward_padded.1} parent=0
    _
  %s10 = ssub.s32 1, %s8
  %s11 = scalar_select 0, %s10, %s8
  $region1: #{_forward_padded.1} parent=0
    #allocation3 [shape = 'u8[1024]{0}', space=vmem, size = 0x400, scoped, tag = 'output window, operand 0']
    #allocation4 [shape = 's32[2]{0}', space=sflag, size = 0x8, scoped, tag = 'scoped memory for _forward_padded.1']
    %12 = vsyncpa [#allocation4], 0
    %s13 = scalar_lea.sflag [#allocation4], 1
    %14 = vsyncpa %s13, 0
    loop: start=0, step=1, limit=4
    $region2: #{_forward_padded.1} parent=1 // loop_pre_header
      _
    $region3: #{_forward_padded.1} parent=1 // loop_header
      %s16 = sphi 0, %s20
      %p17 = scmp.ge.s32.totalorder %s16, 4
      %s23 = sphi 0, %s35
      %s24 = sphi 0, %s31
      %s25 = sphi 0, %s23
      %s26 = sphi 0, %s24
      %s27 = sphi 0, %s25
      %s28 = sphi 0, %s26
      %s40 = sphi 0, %s42
      %s43 = sphi 0, %s40
      %s44 = sphi 0, %s43
      %s60 = sphi 0, %s44
      %s64 = sphi 0, %s64
      %s66 = sphi 0, %s64
      %s67 = sphi 0, %s66
      %s81 = sphi 0, %s67
      %s85 = sphi 0, %s85
      %s87 = sphi 0, %s85
      %s88 = sphi 0, %s87
      %s102 = sphi 0, %s88
      %s106 = sphi 0, %s106
      %s108 = sphi 0, %s106
      %s109 = sphi 0, %s108
      %s123 = sphi 0, %s109
      %s127 = sphi 0, %s127
      %s129 = sphi 0, %s127
      %s130 = sphi 0, %s129
      %s144 = sphi 0, %s130
      %s148 = sphi 0, %s148
      %s150 = sphi 0, %s148
      %s151 = sphi 0, %s150
      %s165 = sphi 0, %s151
      %s169 = sphi 0, %s169
      %s171 = sphi 0, %s169
      %s172 = sphi 0, %s171
      %s186 = sphi 0, %s172
      %s192 = sphi 0, %s194
      %s195 = sphi 0, %s192
      %s196 = sphi 0, %s195
      %s212 = sphi 0, %s196
    $region4: #{_forward_padded.1} parent=1 // loop_header_branch
      %19 = sbr.rel (%p17) target = $region8
    $region5: #{_forward_padded.1} parent=1 // loop_body
      %s21 = ssub.s32 %s16, 1
      %s22 = ssub.s32 %s16, 2
      %s29 = sadd.s32 1, %s24
      %p30 = scmp.ge.s32.totalorder %s29, 1
      %s31 = scalar_select %p30, 0, %s29
      %s32 = sadd.s32 1, %s23
      %s33 = scalar_select %p30, %s32, %s23
      %p34 = scmp.ge.s32.totalorder %s33, 2
      %s35 = scalar_select %p34, 0, %s33
      %s36 = ssub.s32 %s23, %s35
      %s37 = ssub.s32 %s24, %s31
      %s38 = sor.u32 %s36, %s37
      %p39 = scmp.eq.s32.totalorder %s38, 0
      %s41 = sadd.s32 %s40, 1
      %s42 = scalar_select %p39, %s40, %s41
      %p45 = pneg %p39
      %p46 = scmp.eq.s32.totalorder %s16, 1
      %p47 = por %p45, %p46
      %p48 = scmp.ne.s32.totalorder %s40, %s43
      %p49 = scmp.eq.s32.totalorder %s16, 0
      %p50 = por %p48, %p49
      %p51 = scmp.ne.s32.totalorder %s40, %s43
      %p52 = scmp.eq.s32.totalorder %s21, 1
      %p53 = por %p51, %p52
      %p54 = scmp.ne.s32.totalorder %s43, %s44
      %p55 = scmp.eq.s32.totalorder %s21, 0
      %p56 = por %p54, %p55
      %p57 = scmp.ne.s32.totalorder %s43, %s44
      %p58 = scmp.eq.s32.totalorder %s22, 1
      %p59 = por %p57, %p58
      %p61 = scmp.ne.s32.totalorder %s44, %s60
      %p62 = scmp.eq.s32.totalorder %s22, 0
      %p63 = por %p61, %p62
      %s65 = sadd.s32 %s64, 1
      %p68 = scmp.eq.s32.totalorder %s16, 1
      %p69 = scmp.ne.s32.totalorder %s64, %s66
      %p70 = scmp.eq.s32.totalorder %s16, 0
      %p71 = por %p69, %p70
      %p72 = scmp.ne.s32.totalorder %s64, %s66
      %p73 = scmp.eq.s32.totalorder %s21, 1
      %p74 = por %p72, %p73
      %p75 = scmp.ne.s32.totalorder %s66, %s67
      %p76 = scmp.eq.s32.totalorder %s21, 0
      %p77 = por %p75, %p76
      %p78 = scmp.ne.s32.totalorder %s66, %s67
      %p79 = scmp.eq.s32.totalorder %s22, 1
      %p80 = por %p78, %p79
      %p82 = scmp.ne.s32.totalorder %s67, %s81
      %p83 = scmp.eq.s32.totalorder %s22, 0
      %p84 = por %p82, %p83
      %s86 = sadd.s32 %s85, 1
      %p89 = scmp.eq.s32.totalorder %s16, 1
      %p90 = scmp.ne.s32.totalorder %s85, %s87
      %p91 = scmp.eq.s32.totalorder %s16, 0
      %p92 = por %p90, %p91
      %p93 = scmp.ne.s32.totalorder %s85, %s87
      %p94 = scmp.eq.s32.totalorder %s21, 1
      %p95 = por %p93, %p94
      %p96 = scmp.ne.s32.totalorder %s87, %s88
      %p97 = scmp.eq.s32.totalorder %s21, 0
      %p98 = por %p96, %p97
      %p99 = scmp.ne.s32.totalorder %s87, %s88
      %p100 = scmp.eq.s32.totalorder %s22, 1
      %p101 = por %p99, %p100
      %p103 = scmp.ne.s32.totalorder %s88, %s102
      %p104 = scmp.eq.s32.totalorder %s22, 0
      %p105 = por %p103, %p104
      %s107 = sadd.s32 %s106, 1
      %p110 = scmp.eq.s32.totalorder %s16, 1
      %p111 = scmp.ne.s32.totalorder %s106, %s108
      %p112 = scmp.eq.s32.totalorder %s16, 0
      %p113 = por %p111, %p112
      %p114 = scmp.ne.s32.totalorder %s106, %s108
      %p115 = scmp.eq.s32.totalorder %s21, 1
      %p116 = por %p114, %p115
      %p117 = scmp.ne.s32.totalorder %s108, %s109
      %p118 = scmp.eq.s32.totalorder %s21, 0
      %p119 = por %p117, %p118
      %p120 = scmp.ne.s32.totalorder %s108, %s109
      %p121 = scmp.eq.s32.totalorder %s22, 1
      %p122 = por %p120, %p121
      %p124 = scmp.ne.s32.totalorder %s109, %s123
      %p125 = scmp.eq.s32.totalorder %s22, 0
      %p126 = por %p124, %p125
      %s128 = sadd.s32 %s127, 1
      %p131 = scmp.eq.s32.totalorder %s16, 1
      %p132 = scmp.ne.s32.totalorder %s127, %s129
      %p133 = scmp.eq.s32.totalorder %s16, 0
      %p134 = por %p132, %p133
      %p135 = scmp.ne.s32.totalorder %s127, %s129
      %p136 = scmp.eq.s32.totalorder %s21, 1
      %p137 = por %p135, %p136
      %p138 = scmp.ne.s32.totalorder %s129, %s130
      %p139 = scmp.eq.s32.totalorder %s21, 0
      %p140 = por %p138, %p139
      %p141 = scmp.ne.s32.totalorder %s129, %s130
      %p142 = scmp.eq.s32.totalorder %s22, 1
      %p143 = por %p141, %p142
      %p145 = scmp.ne.s32.totalorder %s130, %s144
      %p146 = scmp.eq.s32.totalorder %s22, 0
      %p147 = por %p145, %p146
      %s149 = sadd.s32 %s148, 1
      %p152 = scmp.eq.s32.totalorder %s16, 1
      %p153 = scmp.ne.s32.totalorder %s148, %s150
      %p154 = scmp.eq.s32.totalorder %s16, 0
      %p155 = por %p153, %p154
      %p156 = scmp.ne.s32.totalorder %s148, %s150
      %p157 = scmp.eq.s32.totalorder %s21, 1
      %p158 = por %p156, %p157
      %p159 = scmp.ne.s32.totalorder %s150, %s151
      %p160 = scmp.eq.s32.totalorder %s21, 0
      %p161 = por %p159, %p160
      %p162 = scmp.ne.s32.totalorder %s150, %s151
      %p163 = scmp.eq.s32.totalorder %s22, 1
      %p164 = por %p162, %p163
      %p166 = scmp.ne.s32.totalorder %s151, %s165
      %p167 = scmp.eq.s32.totalorder %s22, 0
      %p168 = por %p166, %p167
      %s170 = sadd.s32 %s169, 1
      %p173 = scmp.eq.s32.totalorder %s16, 1
      %p174 = scmp.ne.s32.totalorder %s169, %s171
      %p175 = scmp.eq.s32.totalorder %s16, 0
      %p176 = por %p174, %p175
      %p177 = scmp.ne.s32.totalorder %s169, %s171
      %p178 = scmp.eq.s32.totalorder %s21, 1
      %p179 = por %p177, %p178
      %p180 = scmp.ne.s32.totalorder %s171, %s172
      %p181 = scmp.eq.s32.totalorder %s21, 0
      %p182 = por %p180, %p181
      %p183 = scmp.ne.s32.totalorder %s171, %s172
      %p184 = scmp.eq.s32.totalorder %s22, 1
      %p185 = por %p183, %p184
      %p187 = scmp.ne.s32.totalorder %s172, %s186
      %p188 = scmp.eq.s32.totalorder %s22, 0
      %p189 = por %p187, %p188
      %s190 = ssub.s32 %s23, %s35
      %p191 = scmp.eq.s32.totalorder %s190, 0
      %s193 = sadd.s32 %s192, 1
      %s194 = scalar_select %p191, %s192, %s193
      %p197 = pneg %p191
      %p198 = scmp.eq.s32.totalorder %s16, 1
      %p199 = por %p197, %p198
      %p200 = scmp.ne.s32.totalorder %s192, %s195
      %p201 = scmp.eq.s32.totalorder %s16, 0
      %p202 = por %p200, %p201
      %p203 = scmp.ne.s32.totalorder %s192, %s195
      %p204 = scmp.eq.s32.totalorder %s21, 1
      %p205 = por %p203, %p204
      %p206 = scmp.ne.s32.totalorder %s195, %s196
      %p207 = scmp.eq.s32.totalorder %s21, 0
      %p208 = por %p206, %p207
      %p209 = scmp.ne.s32.totalorder %s195, %s196
      %p210 = scmp.eq.s32.totalorder %s22, 1
      %p211 = por %p209, %p210
      %p213 = scmp.ne.s32.totalorder %s196, %s212
      %p214 = scmp.eq.s32.totalorder %s22, 0
      %p215 = por %p213, %p214
      %p216 = scmp.le.s32.totalorder 1, %s16
      %p217 = scmp.lt.s32.totalorder %s16, 3
      %p218 = pnand %p216, %p217
      %p219 = pneg %p218
      // Predicated region
      $region9: #{_forward_padded.1} parent=5 // pred_check
        _
      $region10: #{_forward_padded.1} parent=5 // pred_check_branch
        %221 = sbr.rel (%p218) target = $region12
      $region11: #{_forward_padded.1} parent=5 // pred_region
        %s222 = ssub.s32 %s16, 1
        // Predicated region
        $region13: #{_forward_padded.1} parent=11 // pred_check
          %p223 = pneg %p77
        $region14: #{_forward_padded.1} parent=11 // pred_check_branch
          %225 = sbr.rel (%p223) target = $region16
        $region15: #{_forward_padded.1} parent=11 // pred_region
          _
        $region16: #{_forward_padded.1} parent=11 // pred_fallthru
          _
        // Predicated region
        $region17: #{_forward_padded.1} parent=11 // pred_check
          %p226 = pneg %p98
        $region18: #{_forward_padded.1} parent=11 // pred_check_branch
          %228 = sbr.rel (%p226) target = $region20
        $region19: #{_forward_padded.1} parent=11 // pred_region
          _
        $region20: #{_forward_padded.1} parent=11 // pred_fallthru
          _
        // Predicated region
        $region21: #{_forward_padded.1} parent=11 // pred_check
          %p229 = pneg %p119
        $region22: #{_forward_padded.1} parent=11 // pred_check_branch
          %231 = sbr.rel (%p229) target = $region24
        $region23: #{_forward_padded.1} parent=11 // pred_region
          _
        $region24: #{_forward_padded.1} parent=11 // pred_fallthru
          _
        // Predicated region
        $region25: #{_forward_padded.1} parent=11 // pred_check
          %p232 = pneg %p140
        $region26: #{_forward_padded.1} parent=11 // pred_check_branch
          %234 = sbr.rel (%p232) target = $region28
        $region27: #{_forward_padded.1} parent=11 // pred_region
          _
        $region28: #{_forward_padded.1} parent=11 // pred_fallthru
          _
        // Predicated region
        $region29: #{_forward_padded.1} parent=11 // pred_check
          %p235 = pneg %p161
        $region30: #{_forward_padded.1} parent=11 // pred_check_branch
          %237 = sbr.rel (%p235) target = $region32
        $region31: #{_forward_padded.1} parent=11 // pred_region
          _
        $region32: #{_forward_padded.1} parent=11 // pred_fallthru
          _
        // Predicated region
        $region33: #{_forward_padded.1} parent=11 // pred_check
          %p238 = pneg %p182
        $region34: #{_forward_padded.1} parent=11 // pred_check_branch
          %240 = sbr.rel (%p238) target = $region36
        $region35: #{_forward_padded.1} parent=11 // pred_region
          _
        $region36: #{_forward_padded.1} parent=11 // pred_fallthru
          _
      $region12: #{_forward_padded.1} parent=5 // pred_fallthru
        _
      %p241 = scmp.lt.s32.totalorder %s16, 2
      // Predicated region
      $region37: #{_forward_padded.1} parent=5 // pred_check
        %p242 = pneg %p241
      $region38: #{_forward_padded.1} parent=5 // pred_check_branch
        %244 = sbr.rel (%p242) target = $region40
      $region39: #{_forward_padded.1} parent=5 // pred_region
        // Predicated region
        $region41: #{_forward_padded.1} parent=39 // pred_check
          %p245 = pneg %p50
        $region42: #{_forward_padded.1} parent=39 // pred_check_branch
          %247 = sbr.rel (%p245) target = $region44
        $region43: #{_forward_padded.1} parent=39 // pred_region
          %s248 = smul.u32 8, %s24
          %p249 = scmp.lt.s32.totalorder %s23, 1
          %s250 = scalar_select %p249, %s23, 1
          %p251 = scmp.lt.s32.totalorder %s248, 7
          %s252 = scalar_select %p251, %s248, 7
          %s253 = smul.addr %s252, 2
          %s254 = smul.addr %s250, 16
          %s255 = sadd.s32 %s253, %s254
          %s256 = smul.addr %s255, 4
          %s257 = scalar_lea.vmem %s0, %s256
          %s258 = smul.u32 8, %s24
        $region44: #{_forward_padded.1} parent=39 // pred_fallthru
          _
      $region40: #{_forward_padded.1} parent=5 // pred_fallthru
        _
      %p259 = scmp.le.s32.totalorder 1, %s16
      %p260 = scmp.lt.s32.totalorder %s16, 3
      %p261 = pnand %p259, %p260
      %p262 = pneg %p261
      // Predicated region
      $region45: #{_forward_padded.1} parent=5 // pred_check
        _
      $region46: #{_forward_padded.1} parent=5 // pred_check_branch
        %264 = sbr.rel (%p261) target = $region48
      $region47: #{_forward_padded.1} parent=5 // pred_region
        %s265 = ssub.s32 %s16, 1
        %s266 = smul.u32 8, %s26
        %p267 = scmp.lt.s32.totalorder %s25, 1
        %s268 = scalar_select %p267, %s25, 1
        %p269 = scmp.lt.s32.totalorder %s266, 7
        %s270 = scalar_select %p269, %s266, 7
        %s271 = smul.addr %s270, 2
        %s272 = smul.addr %s268, 16
        %s273 = sadd.s32 %s271, %s272
        %s274 = smul.addr %s273, 4
        %s275 = scalar_lea.vmem %s0, %s274
        %p276 = pneg %p56
        %p277 = pneg %p53
        %p278 = pneg %p77
        %p279 = pneg %p74
        %p280 = pneg %p98
        %p281 = pneg %p95
        %p282 = pneg %p119
        %p283 = pneg %p116
        %p284 = pneg %p140
        %p285 = pneg %p137
        %p286 = pneg %p161
        %p287 = pneg %p158
        %p288 = pneg %p182
        %p289 = pneg %p179
        %p290 = pneg %p208
        %p291 = pneg %p205
        %s292 = sand.u32 %s195, 1
        %s293 = scalar_lea.sflag [#allocation4], %s292
        %s294 = sand.u32 %s195, 1
        %s295 = scalar_lea.vmem [#allocation3], %s294
        %s296 = smul.u32 8, %s26
        %p297 = scmp.lt.s32.totalorder %s25, 1
        %s298 = scalar_select %p297, %s25, 1
        %p299 = scmp.lt.s32.totalorder %s296, 7
        %s300 = scalar_select %p299, %s296, 7
        %s301 = smul.addr %s300, 2
        %s302 = smul.addr %s298, 16
        %s303 = sadd.s32 %s301, %s302
        %s304 = smul.addr %s303, 4
        %s305 = scalar_lea.vmem %s0, %s304
        %s306 = smul.u32 8, %s26
        %p308 = scmp.eq.s32.totalorder %s26, 0
        // Predicated region
        $region49: #{_forward_padded.1} parent=47 // pred_check
          %p309 = pneg %p308
        $region50: #{_forward_padded.1} parent=47 // pred_check_branch
          %311 = sbr.rel (%p309) target = $region52
        $region51: #{_forward_padded.1} parent=47 // pred_region
          %312 = vst [vmem:[#allocation2] sm:$0xff] 0.0
        $region52: #{_forward_padded.1} parent=47 // pred_fallthru
          _
        %v313 = vld [vmem:[%s305] sm:$0xff]
        %v314 = vld [vmem:[%s305 + $0x8] sm:$0xff]
        %v315 = vld [vmem:[%s305 + $0x10] sm:$0xff]
        %v316 = vld [vmem:[%s305 + $0x18] sm:$0xff]
        %v317 = vld [vmem:[%s305 + $0x20] sm:$0xff]
        %v318 = vld [vmem:[%s305 + $0x28] sm:$0xff]
        %v319 = vld [vmem:[%s305 + $0x30] sm:$0xff]
        %v320 = vld [vmem:[%s305 + $0x38] sm:$0xff]
        %v321 = vld [vmem:[%s1] sm:$0xf]
        %v322 = vld [vmem:[%s1 + $0x4] sm:$0xf]
        %v323 = vld [vmem:[%s1 + $0x8] sm:$0xf]
        %v324 = vld [vmem:[%s1 + $0xc] sm:$0xf]
        %v325 = vld [vmem:[%s1 + $0x10] sm:$0xf]
        %v326 = vld [vmem:[%s1 + $0x14] sm:$0xf]
        %v327 = vld [vmem:[%s1 + $0x18] sm:$0xf]
        %v328 = vld [vmem:[%s1 + $0x1c] sm:$0xf]
        %v329 = vld [vmem:[%s1 + $0x20] sm:$0xf]
        %v330 = vld [vmem:[%s1 + $0x24] sm:$0xf]
        %v331 = vld [vmem:[%s1 + $0x28] sm:$0xf]
        %v332 = vld [vmem:[%s1 + $0x2c] sm:$0xf]
        %v333 = vld [vmem:[%s1 + $0x30] sm:$0xf]
        %v334 = vld [vmem:[%s1 + $0x34] sm:$0xf]
        %v335 = vld [vmem:[%s1 + $0x38] sm:$0xf]
        %v336 = vld [vmem:[%s1 + $0x3c] sm:$0xf]
        %v337 = vld [vmem:[%s1 + $0x40] sm:$0xf]
        %v338 = vld [vmem:[%s1 + $0x44] sm:$0xf]
        %v339 = vld [vmem:[%s1 + $0x48] sm:$0xf]
        %v340 = vld [vmem:[%s1 + $0x4c] sm:$0xf]
        %v341 = vld [vmem:[%s1 + $0x50] sm:$0xf]
        %v342 = vld [vmem:[%s1 + $0x54] sm:$0xf]
        %v343 = vld [vmem:[%s1 + $0x58] sm:$0xf]
        %v344 = vld [vmem:[%s1 + $0x5c] sm:$0xf]
        %v345 = vld [vmem:[%s1 + $0x60] sm:$0xf]
        %v346 = vld [vmem:[%s1 + $0x64] sm:$0xf]
        %v347 = vld [vmem:[%s1 + $0x68] sm:$0xf]
        %v348 = vld [vmem:[%s1 + $0x6c] sm:$0xf]
        %v349 = vld [vmem:[%s1 + $0x70] sm:$0xf]
        %v350 = vld [vmem:[%s1 + $0x74] sm:$0xf]
        %v351 = vld [vmem:[%s1 + $0x78] sm:$0xf]
        %v352 = vld [vmem:[%s1 + $0x7c] sm:$0xf]
        %v353 = vld [vmem:[%s2] sm:$0x1]
        %v355 = vlaneseq
        %v356 = vshrl.u32 %v355, 7
        %v357 = vsub.s32 0, %v356
        %v358 = vrot.slane %v353, %v357
        %v368 = vunpack.c.l.b16 %v313
        %v369 = vunpack.c.h.b16 %v313
        %v370 = vunpack.c.l.b16 %v314
        %v371 = vunpack.c.h.b16 %v314
        %v372 = vunpack.c.l.b16 %v315
        %v373 = vunpack.c.h.b16 %v315
        %v374 = vunpack.c.l.b16 %v316
        %v375 = vunpack.c.h.b16 %v316
        %v376 = vunpack.c.l.b16 %v317
        %v377 = vunpack.c.h.b16 %v317
        %v378 = vunpack.c.l.b16 %v318
        %v379 = vunpack.c.h.b16 %v318
        %v380 = vunpack.c.l.b16 %v319
        %v381 = vunpack.c.h.b16 %v319
        %v382 = vunpack.c.l.b16 %v320
        %v383 = vunpack.c.h.b16 %v320
        %v384 = vpack.c.b16 %v370, %v368
        %v385 = vpack.c.b16 %v371, %v369
        %v386 = vpack.c.b16 %v374, %v372
        %v387 = vpack.c.b16 %v375, %v373
        %v388 = vpack.c.b16 %v378, %v376
        %v389 = vpack.c.b16 %v379, %v377
        %v390 = vpack.c.b16 %v382, %v380
        %v391 = vpack.c.b16 %v383, %v381
        %v432 = vunpack.c.l.b16 %v321
        %v433 = vunpack.c.l.b16 %v322
        %v434 = vunpack.c.l.b16 %v323
        %v435 = vunpack.c.l.b16 %v324
        %v436 = vunpack.c.l.b16 %v325
        %v437 = vunpack.c.l.b16 %v326
        %v438 = vunpack.c.l.b16 %v327
        %v439 = vunpack.c.l.b16 %v328
        %v440 = vunpack.c.l.b16 %v329
        %v441 = vunpack.c.l.b16 %v330
        %v442 = vunpack.c.l.b16 %v331
        %v443 = vunpack.c.l.b16 %v332
        %v444 = vunpack.c.l.b16 %v333
        %v445 = vunpack.c.l.b16 %v334
        %v446 = vunpack.c.l.b16 %v335
        %v447 = vunpack.c.l.b16 %v336
        %v448 = vunpack.c.l.b16 %v337
        %v449 = vunpack.c.l.b16 %v338
        %v450 = vunpack.c.l.b16 %v339
        %v451 = vunpack.c.l.b16 %v340
        %v452 = vunpack.c.l.b16 %v341
        %v453 = vunpack.c.l.b16 %v342
        %v454 = vunpack.c.l.b16 %v343
        %v455 = vunpack.c.l.b16 %v344
        %v456 = vunpack.c.l.b16 %v345
        %v457 = vunpack.c.l.b16 %v346
        %v458 = vunpack.c.l.b16 %v347
        %v459 = vunpack.c.l.b16 %v348
        %v460 = vunpack.c.l.b16 %v349
        %v461 = vunpack.c.l.b16 %v350
        %v462 = vunpack.c.l.b16 %v351
        %v463 = vunpack.c.l.b16 %v352
        %v464 = vpack.c.b16 %v433, %v432
        %v465 = vpack.c.b16 %v435, %v434
        %v466 = vpack.c.b16 %v437, %v436
        %v467 = vpack.c.b16 %v439, %v438
        %v468 = vpack.c.b16 %v441, %v440
        %v469 = vpack.c.b16 %v443, %v442
        %v470 = vpack.c.b16 %v445, %v444
        %v471 = vpack.c.b16 %v447, %v446
        %v472 = vpack.c.b16 %v449, %v448
        %v473 = vpack.c.b16 %v451, %v450
        %v474 = vpack.c.b16 %v453, %v452
        %v475 = vpack.c.b16 %v455, %v454
        %v476 = vpack.c.b16 %v457, %v456
        %v477 = vpack.c.b16 %v459, %v458
        %v478 = vpack.c.b16 %v461, %v460
        %v479 = vpack.c.b16 %v463, %v462
        %496 = vmatprep.subr.bf16.mxu0 0
        %497 = vmatpush1.bf16.msra.mxu0 %v464
        %498 = vmatprep.subr.bf16.mxu0 0
        %499 = vmatpush1.bf16.msra.mxu0 %v465
        %500 = vmatprep.subr.bf16.mxu0 0
        %501 = vmatpush1.bf16.msra.mxu0 %v466
        %502 = vmatprep.subr.bf16.mxu0 0
        %503 = vmatpush1.bf16.msra.mxu0 %v467
        %504 = vmatprep.subr.bf16.mxu0 0
        %505 = vmatpush1.bf16.msra.mxu0 %v468
        %506 = vmatprep.subr.bf16.mxu0 0
        %507 = vmatpush1.bf16.msra.mxu0 %v469
        %508 = vmatprep.subr.bf16.mxu0 0
        %509 = vmatpush1.bf16.msra.mxu0 %v470
        %510 = vmatprep.subr.bf16.mxu0 0
        %511 = vmatpush1.bf16.msra.mxu0 %v471
        %512 = vmatprep.subr.bf16.mxu0 0
        %513 = vmatpush1.bf16.msra.mxu0 %v472
        %514 = vmatprep.subr.bf16.mxu0 0
        %515 = vmatpush1.bf16.msra.mxu0 %v473
        %516 = vmatprep.subr.bf16.mxu0 0
        %517 = vmatpush1.bf16.msra.mxu0 %v474
        %518 = vmatprep.subr.bf16.mxu0 0
        %519 = vmatpush1.bf16.msra.mxu0 %v475
        %520 = vmatprep.subr.bf16.mxu0 0
        %521 = vmatpush1.bf16.msra.mxu0 %v476
        %522 = vmatprep.subr.bf16.mxu0 0
        %523 = vmatpush1.bf16.msra.mxu0 %v477
        %524 = vmatprep.subr.bf16.mxu0 0
        %525 = vmatpush1.bf16.msra.mxu0 %v478
        %526 = vmatprep.subr.bf16.mxu0 0
        %527 = vmatpush1.bf16.msra.mxu0 %v479
        %528 = vmatprep.mubr.bf16.mxu0 %v385
        %529 = vmatmul.mubr.bf16.gmra.mrb[0].mxu0 %v384
        %v530 = vpop.f32.mrb[0].mxu0
        %v531 = vadd.f32 %v358, %v530
        %v532 = vpop.f32.mrb[0].mxu0
        %v533 = vpop.f32.mrb[0].mxu0
        %v534 = vadd.f32 %v358, %v533
        %v535 = vpop.f32.mrb[0].mxu0
        %536 = vmatprep.mubr.bf16.mxu0 %v387
        %537 = vmatmul.mubr.bf16.gmra.mrb[0].mxu0 %v386
        %v538 = vpop.f32.mrb[0].mxu0
        %v539 = vadd.f32 %v358, %v538
        %v540 = vpop.f32.mrb[0].mxu0
        %v541 = vpop.f32.mrb[0].mxu0
        %v542 = vadd.f32 %v358, %v541
        %v543 = vpop.f32.mrb[0].mxu0
        %544 = vmatprep.mubr.bf16.mxu0 %v389
        %545 = vmatmul.mubr.bf16.gmra.mrb[0].mxu0 %v388
        %v546 = vpop.f32.mrb[0].mxu0
        %v547 = vadd.f32 %v358, %v546
        %v548 = vpop.f32.mrb[0].mxu0
        %v549 = vpop.f32.mrb[0].mxu0
        %v550 = vadd.f32 %v358, %v549
        %v551 = vpop.f32.mrb[0].mxu0
        %552 = vmatprep.mubr.bf16.mxu0 %v391
        %553 = vmatmul.mubr.bf16.gmra.mrb[0].mxu0 %v390
        %v554 = vpop.f32.mrb[0].mxu0
        %v555 = vadd.f32 %v358, %v554
        %v556 = vpop.f32.mrb[0].mxu0
        %v557 = vpop.f32.mrb[0].mxu0
        %v558 = vadd.f32 %v358, %v557
        %v559 = vpop.f32.mrb[0].mxu0
        %560 = vdwg.mxu0
        %v561 = vmax.f32 %v531, 0.0
        %v562 = vmax.f32 %v534, 0.0
        %v563 = vmax.f32 %v539, 0.0
        %v564 = vmax.f32 %v542, 0.0
        %v565 = vmax.f32 %v547, 0.0
        %v566 = vmax.f32 %v550, 0.0
        %v567 = vmax.f32 %v555, 0.0
        %v568 = vmax.f32 %v558, 0.0
        %v569 = vld [vmem:[#allocation2] sm:$0x1]
        %v570 = vadd.f32 %v561, %v562
        %v571 = vadd.f32 %v570, %v563
        %v572 = vadd.f32 %v571, %v564
        %v573 = vadd.f32 %v572, %v565
        %v574 = vadd.f32 %v573, %v566
        %v575 = vadd.f32 %v574, %v567
        %v576 = vadd.f32 %v575, %v568
        %v577 = vrot.slane %v576, 4
        %v578 = vadd.f32 %v576, %v577
        %v579 = vrot.slane %v578, 2
        %v580 = vadd.f32 %v578, %v579
        %v581 = vrot.slane %v580, 1
        %v582 = vadd.f32 %v580, %v581
        %v583 = vadd.f32 %v569, %v582
        %584 = vst [vmem:[#allocation2] sm:$0x1] %v583
        // Predicated region
        $region53: #{_forward_padded.1} parent=47 // pred_check
          %p585 = pneg %p308
        $region54: #{_forward_padded.1} parent=47 // pred_check_branch
          %587 = sbr.rel (%p585) target = $region56
        $region55: #{_forward_padded.1} parent=47 // pred_region
          %v588 = vld [vmem:[#allocation2] sm:$0x1]
          %v589 = vmul.f32 %v588, 0.015625
          %v590 = vpack.c.bf16 %v589, %v589
          %v591 = vld [vmem:[%s3] sm:$0xff]
          %v592 = vld [vmem:[%s3 + $0x8] sm:$0xff]
          %v593 = vld [vmem:[%s3 + $0x10] sm:$0xff]
          %v594 = vld [vmem:[%s3 + $0x18] sm:$0xff]
          %v595 = vld [vmem:[%s3 + $0x20] sm:$0xff]
          %v596 = vld [vmem:[%s3 + $0x28] sm:$0xff]
          %v597 = vld [vmem:[%s3 + $0x30] sm:$0xff]
          %v598 = vld [vmem:[%s3 + $0x38] sm:$0xff]
          %v599 = vld [vmem:[%s3 + $0x40] sm:$0xff]
          %v600 = vld [vmem:[%s3 + $0x48] sm:$0xff]
          %v601 = vld [vmem:[%s3 + $0x50] sm:$0xff]
          %v602 = vld [vmem:[%s3 + $0x58] sm:$0xff]
          %v603 = vld [vmem:[%s3 + $0x60] sm:$0xff]
          %v604 = vld [vmem:[%s3 + $0x68] sm:$0xff]
          %v605 = vld [vmem:[%s3 + $0x70] sm:$0xff]
          %v606 = vld [vmem:[%s3 + $0x78] sm:$0xff]
          %v607 = vld [vmem:[%s3 + $0x80] sm:$0xff]
          %v608 = vld [vmem:[%s3 + $0x88] sm:$0xff]
          %v609 = vld [vmem:[%s3 + $0x90] sm:$0xff]
          %v610 = vld [vmem:[%s3 + $0x98] sm:$0xff]
          %v611 = vld [vmem:[%s3 + $0xa0] sm:$0xff]
          %v612 = vld [vmem:[%s3 + $0xa8] sm:$0xff]
          %v613 = vld [vmem:[%s3 + $0xb0] sm:$0xff]
          %v614 = vld [vmem:[%s3 + $0xb8] sm:$0xff]
          %v615 = vld [vmem:[%s3 + $0xc0] sm:$0xff]
          %v616 = vld [vmem:[%s3 + $0xc8] sm:$0xff]
          %v617 = vld [vmem:[%s3 + $0xd0] sm:$0xff]
          %v618 = vld [vmem:[%s3 + $0xd8] sm:$0xff]
          %v619 = vld [vmem:[%s3 + $0xe0] sm:$0xff]
          %v620 = vld [vmem:[%s3 + $0xe8] sm:$0xff]
          %v621 = vld [vmem:[%s3 + $0xf0] sm:$0xff]
          %v622 = vld [vmem:[%s3 + $0xf8] sm:$0xff]
          %v623 = vld [vmem:[%s4] sm:$0xf]
          %v656 = vunpack.c.l.b16 %v591
          %v657 = vunpack.c.h.b16 %v591
          %v658 = vunpack.c.l.b16 %v592
          %v659 = vunpack.c.h.b16 %v592
          %v660 = vunpack.c.l.b16 %v593
          %v661 = vunpack.c.h.b16 %v593
          %v662 = vunpack.c.l.b16 %v594
          %v663 = vunpack.c.h.b16 %v594
          %v664 = vunpack.c.l.b16 %v595
          %v665 = vunpack.c.h.b16 %v595
          %v666 = vunpack.c.l.b16 %v596
          %v667 = vunpack.c.h.b16 %v596
          %v668 = vunpack.c.l.b16 %v597
          %v669 = vunpack.c.h.b16 %v597
          %v670 = vunpack.c.l.b16 %v598
          %v671 = vunpack.c.h.b16 %v598
          %v672 = vunpack.c.l.b16 %v599
          %v673 = vunpack.c.h.b16 %v599
          %v674 = vunpack.c.l.b16 %v600
          %v675 = vunpack.c.h.b16 %v600
          %v676 = vunpack.c.l.b16 %v601
          %v677 = vunpack.c.h.b16 %v601
          %v678 = vunpack.c.l.b16 %v602
          %v679 = vunpack.c.h.b16 %v602
          %v680 = vunpack.c.l.b16 %v603
          %v681 = vunpack.c.h.b16 %v603
          %v682 = vunpack.c.l.b16 %v604
          %v683 = vunpack.c.h.b16 %v604
          %v684 = vunpack.c.l.b16 %v605
          %v685 = vunpack.c.h.b16 %v605
          %v686 = vunpack.c.l.b16 %v606
          %v687 = vunpack.c.h.b16 %v606
          %v688 = vunpack.c.l.b16 %v607
          %v689 = vunpack.c.h.b16 %v607
          %v690 = vunpack.c.l.b16 %v608
          %v691 = vunpack.c.h.b16 %v608
          %v692 = vunpack.c.l.b16 %v609
          %v693 = vunpack.c.h.b16 %v609
          %v694 = vunpack.c.l.b16 %v610
          %v695 = vunpack.c.h.b16 %v610
          %v696 = vunpack.c.l.b16 %v611
          %v697 = vunpack.c.h.b16 %v611
          %v698 = vunpack.c.l.b16 %v612
          %v699 = vunpack.c.h.b16 %v612
          %v700 = vunpack.c.l.b16 %v613
          %v701 = vunpack.c.h.b16 %v613
          %v702 = vunpack.c.l.b16 %v614
          %v703 = vunpack.c.h.b16 %v614
          %v704 = vunpack.c.l.b16 %v615
          %v705 = vunpack.c.h.b16 %v615
          %v706 = vunpack.c.l.b16 %v616
          %v707 = vunpack.c.h.b16 %v616
          %v708 = vunpack.c.l.b16 %v617
          %v709 = vunpack.c.h.b16 %v617
          %v710 = vunpack.c.l.b16 %v618
          %v711 = vunpack.c.h.b16 %v618
          %v712 = vunpack.c.l.b16 %v619
          %v713 = vunpack.c.h.b16 %v619
          %v714 = vunpack.c.l.b16 %v620
          %v715 = vunpack.c.h.b16 %v620
          %v716 = vunpack.c.l.b16 %v621
          %v717 = vunpack.c.h.b16 %v621
          %v718 = vunpack.c.l.b16 %v622
          %v719 = vunpack.c.h.b16 %v622
          %v720 = vpack.c.b16 %v660, %v656
          %v721 = vpack.c.b16 %v661, %v657
          %v722 = vpack.c.b16 %v662, %v658
          %v723 = vpack.c.b16 %v663, %v659
          %v724 = vpack.c.b16 %v668, %v664
          %v725 = vpack.c.b16 %v669, %v665
          %v726 = vpack.c.b16 %v670, %v666
          %v727 = vpack.c.b16 %v671, %v667
          %v728 = vpack.c.b16 %v676, %v672
          %v729 = vpack.c.b16 %v677, %v673
          %v730 = vpack.c.b16 %v678, %v674
          %v731 = vpack.c.b16 %v679, %v675
          %v732 = vpack.c.b16 %v684, %v680
          %v733 = vpack.c.b16 %v685, %v681
          %v734 = vpack.c.b16 %v686, %v682
          %v735 = vpack.c.b16 %v687, %v683
          %v736 = vpack.c.b16 %v692, %v688
          %v737 = vpack.c.b16 %v693, %v689
          %v738 = vpack.c.b16 %v694, %v690
          %v739 = vpack.c.b16 %v695, %v691
          %v740 = vpack.c.b16 %v700, %v696
          %v741 = vpack.c.b16 %v701, %v697
          %v742 = vpack.c.b16 %v702, %v698
          %v743 = vpack.c.b16 %v703, %v699
          %v744 = vpack.c.b16 %v708, %v704
          %v745 = vpack.c.b16 %v709, %v705
          %v746 = vpack.c.b16 %v710, %v706
          %v747 = vpack.c.b16 %v711, %v707
          %v748 = vpack.c.b16 %v716, %v712
          %v749 = vpack.c.b16 %v717, %v713
          %v750 = vpack.c.b16 %v718, %v714
          %v751 = vpack.c.b16 %v719, %v715
          %v785 = vlaneseq
          %v786 = vshrl.u32 %v785, 7
          %v787 = vsub.s32 0, %v786
          %v788 = vrot.slane %v623, %v787
          %v789 = vlaneseq
          %v790 = vshrl.u32 %v789, 7
          %v791 = vsub.s32 1, %v790
          %v792 = vrot.slane %v623, %v791
          %v793 = vlaneseq
          %v794 = vshrl.u32 %v793, 7
          %v795 = vsub.s32 2, %v794
          %v796 = vrot.slane %v623, %v795
          %v797 = vlaneseq
          %v798 = vshrl.u32 %v797, 7
          %v799 = vsub.s32 3, %v798
          %v800 = vrot.slane %v623, %v799
          %805 = vmatprep.subr.bf16.mxu0 %v721
          %806 = vmatpush1.bf16.msra.mxu0 %v720
          %807 = vmatprep.subr.bf16.mxu0 %v725
          %808 = vmatpush1.bf16.msra.mxu0 %v724
          %809 = vmatprep.subr.bf16.mxu0 %v729
          %810 = vmatpush1.bf16.msra.mxu0 %v728
          %811 = vmatprep.subr.bf16.mxu0 %v733
          %812 = vmatpush1.bf16.msra.mxu0 %v732
          %813 = vmatprep.subr.bf16.mxu0 %v737
          %814 = vmatpush1.bf16.msra.mxu0 %v736
          %815 = vmatprep.subr.bf16.mxu0 %v741
          %816 = vmatpush1.bf16.msra.mxu0 %v740
          %817 = vmatprep.subr.bf16.mxu0 %v745
          %818 = vmatpush1.bf16.msra.mxu0 %v744
          %819 = vmatprep.subr.bf16.mxu0 %v749
          %820 = vmatpush1.bf16.msra.mxu0 %v748
          %821 = vmatprep.subr.bf16.mxu0 0
          %822 = vmatpush1.bf16.msra.mxu0 0
          %823 = vmatprep.subr.bf16.mxu0 0
          %824 = vmatpush1.bf16.msra.mxu0 0
          %825 = vmatprep.subr.bf16.mxu0 0
          %826 = vmatpush1.bf16.msra.mxu0 0
          %827 = vmatprep.subr.bf16.mxu0 0
          %828 = vmatpush1.bf16.msra.mxu0 0
          %829 = vmatprep.subr.bf16.mxu0 0
          %830 = vmatpush1.bf16.msra.mxu0 0
          %831 = vmatprep.subr.bf16.mxu0 0
          %832 = vmatpush1.bf16.msra.mxu0 0
          %833 = vmatprep.subr.bf16.mxu0 0
          %834 = vmatpush1.bf16.msra.mxu0 0
          %835 = vmatprep.subr.bf16.mxu0 0
          %836 = vmatpush1.bf16.msra.mxu0 0
          %837 = vmatprep.mubr.bf16.mxu0 0
          %838 = vmatmul.mubr.bf16.gmra.mrb[0].mxu0 %v590
          %v839 = vpop.f32.mrb[0].mxu0
          %v840 = vadd.f32 %v788, %v839
          %v841 = vpop.f32.mrb[0].mxu0
          %v842 = vadd.f32 %v792, %v841
          %v843 = vpop.f32.mrb[0].mxu0
          %v844 = vpop.f32.mrb[0].mxu0
          %845 = vdwg.mxu0
          %846 = vmatprep.subr.bf16.mxu0 %v723
          %847 = vmatpush1.bf16.msra.mxu0 %v722
          %848 = vmatprep.subr.bf16.mxu0 %v727
          %849 = vmatpush1.bf16.msra.mxu0 %v726
          %850 = vmatprep.subr.bf16.mxu0 %v731
          %851 = vmatpush1.bf16.msra.mxu0 %v730
          %852 = vmatprep.subr.bf16.mxu0 %v735
          %853 = vmatpush1.bf16.msra.mxu0 %v734
          %854 = vmatprep.subr.bf16.mxu0 %v739
          %855 = vmatpush1.bf16.msra.mxu0 %v738
          %856 = vmatprep.subr.bf16.mxu0 %v743
          %857 = vmatpush1.bf16.msra.mxu0 %v742
          %858 = vmatprep.subr.bf16.mxu0 %v747
          %859 = vmatpush1.bf16.msra.mxu0 %v746
          %860 = vmatprep.subr.bf16.mxu0 %v751
          %861 = vmatpush1.bf16.msra.mxu0 %v750
          %862 = vmatprep.subr.bf16.mxu0 0
          %863 = vmatpush1.bf16.msra.mxu0 0
          %864 = vmatprep.subr.bf16.mxu0 0
          %865 = vmatpush1.bf16.msra.mxu0 0
          %866 = vmatprep.subr.bf16.mxu0 0
          %867 = vmatpush1.bf16.msra.mxu0 0
          %868 = vmatprep.subr.bf16.mxu0 0
          %869 = vmatpush1.bf16.msra.mxu0 0
          %870 = vmatprep.subr.bf16.mxu0 0
          %871 = vmatpush1.bf16.msra.mxu0 0
          %872 = vmatprep.subr.bf16.mxu0 0
          %873 = vmatpush1.bf16.msra.mxu0 0
          %874 = vmatprep.subr.bf16.mxu0 0
          %875 = vmatpush1.bf16.msra.mxu0 0
          %876 = vmatprep.subr.bf16.mxu0 0
          %877 = vmatpush1.bf16.msra.mxu0 0
          %878 = vmatprep.mubr.bf16.mxu0 0
          %879 = vmatmul.mubr.bf16.gmra.mrb[0].mxu0 %v590
          %v880 = vpop.f32.mrb[0].mxu0
          %v881 = vadd.f32 %v796, %v880
          %v882 = vpop.f32.mrb[0].mxu0
          %v883 = vadd.f32 %v800, %v882
          %v884 = vpop.f32.mrb[0].mxu0
          %v885 = vpop.f32.mrb[0].mxu0
          %886 = vdwg.mxu0
          %v887 = vmax.f32 %v840, 0.0
          %v888 = vmax.f32 %v842, 0.0
          %v889 = vmax.f32 %v881, 0.0
          %v890 = vmax.f32 %v883, 0.0
          %v891 = vpack.c.bf16 %v887, %v887
          %v892 = vpack.c.bf16 %v888, %v888
          %v893 = vpack.c.bf16 %v889, %v889
          %v894 = vpack.c.bf16 %v890, %v890
          %v895 = vld [vmem:[%s5] sm:$0xf]
          %v896 = vld [vmem:[%s5 + $0x4] sm:$0xf]
          %v897 = vld [vmem:[%s5 + $0x8] sm:$0xf]
          %v898 = vld [vmem:[%s5 + $0xc] sm:$0xf]
          %v899 = vld [vmem:[%s5 + $0x10] sm:$0xf]
          %v900 = vld [vmem:[%s5 + $0x14] sm:$0xf]
          %v901 = vld [vmem:[%s5 + $0x18] sm:$0xf]
          %v902 = vld [vmem:[%s5 + $0x1c] sm:$0xf]
          %v903 = vld [vmem:[%s5 + $0x20] sm:$0xf]
          %v904 = vld [vmem:[%s5 + $0x24] sm:$0xf]
          %v905 = vld [vmem:[%s5 + $0x28] sm:$0xf]
          %v906 = vld [vmem:[%s5 + $0x2c] sm:$0xf]
          %v907 = vld [vmem:[%s5 + $0x30] sm:$0xf]
          %v908 = vld [vmem:[%s5 + $0x34] sm:$0xf]
          %v909 = vld [vmem:[%s5 + $0x38] sm:$0xf]
          %v910 = vld [vmem:[%s5 + $0x3c] sm:$0xf]
          %v911 = vld [vmem:[%s5 + $0x40] sm:$0xf]
          %v912 = vld [vmem:[%s5 + $0x44] sm:$0xf]
          %v913 = vld [vmem:[%s5 + $0x48] sm:$0xf]
          %v914 = vld [vmem:[%s5 + $0x4c] sm:$0xf]
          %v915 = vld [vmem:[%s5 + $0x50] sm:$0xf]
          %v916 = vld [vmem:[%s5 + $0x54] sm:$0xf]
          %v917 = vld [vmem:[%s5 + $0x58] sm:$0xf]
          %v918 = vld [vmem:[%s5 + $0x5c] sm:$0xf]
          %v919 = vld [vmem:[%s5 + $0x60] sm:$0xf]
          %v920 = vld [vmem:[%s5 + $0x64] sm:$0xf]
          %v921 = vld [vmem:[%s5 + $0x68] sm:$0xf]
          %v922 = vld [vmem:[%s5 + $0x6c] sm:$0xf]
          %v923 = vld [vmem:[%s5 + $0x70] sm:$0xf]
          %v924 = vld [vmem:[%s5 + $0x74] sm:$0xf]
          %v925 = vld [vmem:[%s5 + $0x78] sm:$0xf]
          %v926 = vld [vmem:[%s5 + $0x7c] sm:$0xf]
          %v927 = vld [vmem:[%s5 + $0x80] sm:$0xf]
          %v928 = vld [vmem:[%s5 + $0x84] sm:$0xf]
          %v929 = vld [vmem:[%s5 + $0x88] sm:$0xf]
          %v930 = vld [vmem:[%s5 + $0x8c] sm:$0xf]
          %v931 = vld [vmem:[%s5 + $0x90] sm:$0xf]
          %v932 = vld [vmem:[%s5 + $0x94] sm:$0xf]
          %v933 = vld [vmem:[%s5 + $0x98] sm:$0xf]
          %v934 = vld [vmem:[%s5 + $0x9c] sm:$0xf]
          %v935 = vld [vmem:[%s5 + $0xa0] sm:$0xf]
          %v936 = vld [vmem:[%s5 + $0xa4] sm:$0xf]
          %v937 = vld [vmem:[%s5 + $0xa8] sm:$0xf]
          %v938 = vld [vmem:[%s5 + $0xac] sm:$0xf]
          %v939 = vld [vmem:[%s5 + $0xb0] sm:$0xf]
          %v940 = vld [vmem:[%s5 + $0xb4] sm:$0xf]
          %v941 = vld [vmem:[%s5 + $0xb8] sm:$0xf]
          %v942 = vld [vmem:[%s5 + $0xbc] sm:$0xf]
          %v943 = vld [vmem:[%s5 + $0xc0] sm:$0xf]
          %v944 = vld [vmem:[%s5 + $0xc4] sm:$0xf]
          %v945 = vld [vmem:[%s5 + $0xc8] sm:$0xf]
          %v946 = vld [vmem:[%s5 + $0xcc] sm:$0xf]
          %v947 = vld [vmem:[%s5 + $0xd0] sm:$0xf]
          %v948 = vld [vmem:[%s5 + $0xd4] sm:$0xf]
          %v949 = vld [vmem:[%s5 + $0xd8] sm:$0xf]
          %v950 = vld [vmem:[%s5 + $0xdc] sm:$0xf]
          %v951 = vld [vmem:[%s5 + $0xe0] sm:$0xf]
          %v952 = vld [vmem:[%s5 + $0xe4] sm:$0xf]
          %v953 = vld [vmem:[%s5 + $0xe8] sm:$0xf]
          %v954 = vld [vmem:[%s5 + $0xec] sm:$0xf]
          %v955 = vld [vmem:[%s5 + $0xf0] sm:$0xf]
          %v956 = vld [vmem:[%s5 + $0xf4] sm:$0xf]
          %v957 = vld [vmem:[%s5 + $0xf8] sm:$0xf]
          %v958 = vld [vmem:[%s5 + $0xfc] sm:$0xf]
          %v959 = vld [vmem:[%s6] sm:$0x1]
          %v1024 = vunpack.c.l.b16 %v895
          %v1025 = vunpack.c.l.b16 %v896
          %v1026 = vunpack.c.l.b16 %v897
          %v1027 = vunpack.c.l.b16 %v898
          %v1028 = vunpack.c.l.b16 %v899
          %v1029 = vunpack.c.l.b16 %v900
          %v1030 = vunpack.c.l.b16 %v901
          %v1031 = vunpack.c.l.b16 %v902
          %v1032 = vunpack.c.l.b16 %v903
          %v1033 = vunpack.c.l.b16 %v904
          %v1034 = vunpack.c.l.b16 %v905
          %v1035 = vunpack.c.l.b16 %v906
          %v1036 = vunpack.c.l.b16 %v907
          %v1037 = vunpack.c.l.b16 %v908
          %v1038 = vunpack.c.l.b16 %v909
          %v1039 = vunpack.c.l.b16 %v910
          %v1040 = vunpack.c.l.b16 %v911
          %v1041 = vunpack.c.l.b16 %v912
          %v1042 = vunpack.c.l.b16 %v913
          %v1043 = vunpack.c.l.b16 %v914
          %v1044 = vunpack.c.l.b16 %v915
          %v1045 = vunpack.c.l.b16 %v916
          %v1046 = vunpack.c.l.b16 %v917
          %v1047 = vunpack.c.l.b16 %v918
          %v1048 = vunpack.c.l.b16 %v919
          %v1049 = vunpack.c.l.b16 %v920
          %v1050 = vunpack.c.l.b16 %v921
          %v1051 = vunpack.c.l.b16 %v922
          %v1052 = vunpack.c.l.b16 %v923
          %v1053 = vunpack.c.l.b16 %v924
          %v1054 = vunpack.c.l.b16 %v925
          %v1055 = vunpack.c.l.b16 %v926
          %v1056 = vunpack.c.l.b16 %v927
          %v1057 = vunpack.c.l.b16 %v928
          %v1058 = vunpack.c.l.b16 %v929
          %v1059 = vunpack.c.l.b16 %v930
          %v1060 = vunpack.c.l.b16 %v931
          %v1061 = vunpack.c.l.b16 %v932
          %v1062 = vunpack.c.l.b16 %v933
          %v1063 = vunpack.c.l.b16 %v934
          %v1064 = vunpack.c.l.b16 %v935
          %v1065 = vunpack.c.l.b16 %v936
          %v1066 = vunpack.c.l.b16 %v937
          %v1067 = vunpack.c.l.b16 %v938
          %v1068 = vunpack.c.l.b16 %v939
          %v1069 = vunpack.c.l.b16 %v940
          %v1070 = vunpack.c.l.b16 %v941
          %v1071 = vunpack.c.l.b16 %v942
          %v1072 = vunpack.c.l.b16 %v943
          %v1073 = vunpack.c.l.b16 %v944
          %v1074 = vunpack.c.l.b16 %v945
          %v1075 = vunpack.c.l.b16 %v946
          %v1076 = vunpack.c.l.b16 %v947
          %v1077 = vunpack.c.l.b16 %v948
          %v1078 = vunpack.c.l.b16 %v949
          %v1079 = vunpack.c.l.b16 %v950
          %v1080 = vunpack.c.l.b16 %v951
          %v1081 = vunpack.c.l.b16 %v952
          %v1082 = vunpack.c.l.b16 %v953
          %v1083 = vunpack.c.l.b16 %v954
          %v1084 = vunpack.c.l.b16 %v955
          %v1085 = vunpack.c.l.b16 %v956
          %v1086 = vunpack.c.l.b16 %v957
          %v1087 = vunpack.c.l.b16 %v958
          %v1088 = vpack.c.b16 %v1025, %v1024
          %v1089 = vpack.c.b16 %v1027, %v1026
          %v1090 = vpack.c.b16 %v1029, %v1028
          %v1091 = vpack.c.b16 %v1031, %v1030
          %v1092 = vpack.c.b16 %v1033, %v1032
          %v1093 = vpack.c.b16 %v1035, %v1034
          %v1094 = vpack.c.b16 %v1037, %v1036
          %v1095 = vpack.c.b16 %v1039, %v1038
          %v1096 = vpack.c.b16 %v1041, %v1040
          %v1097 = vpack.c.b16 %v1043, %v1042
          %v1098 = vpack.c.b16 %v1045, %v1044
          %v1099 = vpack.c.b16 %v1047, %v1046
          %v1100 = vpack.c.b16 %v1049, %v1048
          %v1101 = vpack.c.b16 %v1051, %v1050
          %v1102 = vpack.c.b16 %v1053, %v1052
          %v1103 = vpack.c.b16 %v1055, %v1054
          %v1104 = vpack.c.b16 %v1057, %v1056
          %v1105 = vpack.c.b16 %v1059, %v1058
          %v1106 = vpack.c.b16 %v1061, %v1060
          %v1107 = vpack.c.b16 %v1063, %v1062
          %v1108 = vpack.c.b16 %v1065, %v1064
          %v1109 = vpack.c.b16 %v1067, %v1066
          %v1110 = vpack.c.b16 %v1069, %v1068
          %v1111 = vpack.c.b16 %v1071, %v1070
          %v1112 = vpack.c.b16 %v1073, %v1072
          %v1113 = vpack.c.b16 %v1075, %v1074
          %v1114 = vpack.c.b16 %v1077, %v1076
          %v1115 = vpack.c.b16 %v1079, %v1078
          %v1116 = vpack.c.b16 %v1081, %v1080
          %v1117 = vpack.c.b16 %v1083, %v1082
          %v1118 = vpack.c.b16 %v1085, %v1084
          %v1119 = vpack.c.b16 %v1087, %v1086
          %1152 = vmatprep.subr.bf16.mxu0 0
          %1153 = vmatpush1.bf16.msra.mxu0 %v1088
          %1154 = vmatprep.subr.bf16.mxu0 0
          %1155 = vmatpush1.bf16.msra.mxu0 %v1089
          %1156 = vmatprep.subr.bf16.mxu0 0
          %1157 = vmatpush1.bf16.msra.mxu0 %v1090
          %1158 = vmatprep.subr.bf16.mxu0 0
          %1159 = vmatpush1.bf16.msra.mxu0 %v1091
          %1160 = vmatprep.subr.bf16.mxu0 0
          %1161 = vmatpush1.bf16.msra.mxu0 %v1092
          %1162 = vmatprep.subr.bf16.mxu0 0
          %1163 = vmatpush1.bf16.msra.mxu0 %v1093
          %1164 = vmatprep.subr.bf16.mxu0 0
          %1165 = vmatpush1.bf16.msra.mxu0 %v1094
          %1166 = vmatprep.subr.bf16.mxu0 0
          %1167 = vmatpush1.bf16.msra.mxu0 %v1095
          %1168 = vmatprep.subr.bf16.mxu0 0
          %1169 = vmatpush1.bf16.msra.mxu0 %v1096
          %1170 = vmatprep.subr.bf16.mxu0 0
          %1171 = vmatpush1.bf16.msra.mxu0 %v1097
          %1172 = vmatprep.subr.bf16.mxu0 0
          %1173 = vmatpush1.bf16.msra.mxu0 %v1098
          %1174 = vmatprep.subr.bf16.mxu0 0
          %1175 = vmatpush1.bf16.msra.mxu0 %v1099
          %1176 = vmatprep.subr.bf16.mxu0 0
          %1177 = vmatpush1.bf16.msra.mxu0 %v1100
          %1178 = vmatprep.subr.bf16.mxu0 0
          %1179 = vmatpush1.bf16.msra.mxu0 %v1101
          %1180 = vmatprep.subr.bf16.mxu0 0
          %1181 = vmatpush1.bf16.msra.mxu0 %v1102
          %1182 = vmatprep.subr.bf16.mxu0 0
          %1183 = vmatpush1.bf16.msra.mxu0 %v1103
          %1184 = vmatprep.mubr.bf16.mxu0 %v892
          %1185 = vmatmul.mubr.bf16.gmra.mrb[0].mxu0 %v891
          %v1186 = vpop.f32.mrb[0].mxu0
          %v1187 = vadd.f32 %v959, %v1186
          %v1188 = vpop.f32.mrb[0].mxu0
          %v1189 = vpop.f32.mrb[0].mxu0
          %v1190 = vpop.f32.mrb[0].mxu0
          %1191 = vdwg.mxu0
          %1192 = vmatprep.subr.bf16.mxu0 0
          %1193 = vmatpush1.bf16.msra.mxu0 %v1104
          %1194 = vmatprep.subr.bf16.mxu0 0
          %1195 = vmatpush1.bf16.msra.mxu0 %v1105
          %1196 = vmatprep.subr.bf16.mxu0 0
          %1197 = vmatpush1.bf16.msra.mxu0 %v1106
          %1198 = vmatprep.subr.bf16.mxu0 0
          %1199 = vmatpush1.bf16.msra.mxu0 %v1107
          %1200 = vmatprep.subr.bf16.mxu0 0
          %1201 = vmatpush1.bf16.msra.mxu0 %v1108
          %1202 = vmatprep.subr.bf16.mxu0 0
          %1203 = vmatpush1.bf16.msra.mxu0 %v1109
          %1204 = vmatprep.subr.bf16.mxu0 0
          %1205 = vmatpush1.bf16.msra.mxu0 %v1110
          %1206 = vmatprep.subr.bf16.mxu0 0
          %1207 = vmatpush1.bf16.msra.mxu0 %v1111
          %1208 = vmatprep.subr.bf16.mxu0 0
          %1209 = vmatpush1.bf16.msra.mxu0 %v1112
          %1210 = vmatprep.subr.bf16.mxu0 0
          %1211 = vmatpush1.bf16.msra.mxu0 %v1113
          %1212 = vmatprep.subr.bf16.mxu0 0
          %1213 = vmatpush1.bf16.msra.mxu0 %v1114
          %1214 = vmatprep.subr.bf16.mxu0 0
          %1215 = vmatpush1.bf16.msra.mxu0 %v1115
          %1216 = vmatprep.subr.bf16.mxu0 0
          %1217 = vmatpush1.bf16.msra.mxu0 %v1116
          %1218 = vmatprep.subr.bf16.mxu0 0
          %1219 = vmatpush1.bf16.msra.mxu0 %v1117
          %1220 = vmatprep.subr.bf16.mxu0 0
          %1221 = vmatpush1.bf16.msra.mxu0 %v1118
          %1222 = vmatprep.subr.bf16.mxu0 0
          %1223 = vmatpush1.bf16.msra.mxu0 %v1119
          %1224 = vmatprep.mubr.bf16.mxu0 %v894
          %1225 = vmatmul.mubr.bf16.gmra.mrb[0].mxu0 %v893
          %v1226 = vpop.f32.mrb[0].mxu0
          %v1227 = vadd.f32 %v1187, %v1226
          %v1228 = vpop.f32.mrb[0].mxu0
          %v1229 = vpop.f32.mrb[0].mxu0
          %v1230 = vpop.f32.mrb[0].mxu0
          %1231 = vdwg.mxu0
          %1232 = vst [vmem:[%s295] sm:$0x1] %v1227
        $region56: #{_forward_padded.1} parent=47 // pred_fallthru
          _
        %s1233 = sand.u32 %s195, 1
        %s1234 = scalar_lea.sflag [#allocation4], %s1233
        %s1235 = sand.u32 %s195, 1
        %s1236 = scalar_lea.vmem [#allocation3], %s1235
        // Predicated region
        $region57: #{_forward_padded.1} parent=47 // pred_check
          %p1237 = pneg %p205
        $region58: #{_forward_padded.1} parent=47 // pred_check_branch
          %1239 = sbr.rel (%p1237) target = $region60
        $region59: #{_forward_padded.1} parent=47 // pred_region
          %s1241 = ssub.s32 16, 16
          %1242 = vsyncadd %s1234, %s1241
          %s1243 = smul.addr %s25, 16
          %s1244 = scalar_lea.hbm %s7, %s1243
          %s1246 = sshll.u32 %s1236, 4
          %s1247 = int_to_ptr.vmem [resolvable:$true] %s1246
          %1249 = dma.vmem_to_hbm [thread:$0]  %s1247, 16, %s1244, %s1234
        $region60: #{_forward_padded.1} parent=47 // pred_fallthru
          _
      $region48: #{_forward_padded.1} parent=5 // pred_fallthru
        _
      %p1250 = scmp.le.s32.totalorder 2, %s16
      // Predicated region
      $region61: #{_forward_padded.1} parent=5 // pred_check
        %p1251 = pneg %p1250
      $region62: #{_forward_padded.1} parent=5 // pred_check_branch
        %1253 = sbr.rel (%p1251) target = $region64
      $region63: #{_forward_padded.1} parent=5 // pred_region
        %s1254 = ssub.s32 %s16, 2
        // Predicated region
        $region65: #{_forward_padded.1} parent=63 // pred_check
          %p1255 = pneg %p211
        $region66: #{_forward_padded.1} parent=63 // pred_check_branch
          %1257 = sbr.rel (%p1255) target = $region68
        $region67: #{_forward_padded.1} parent=63 // pred_region
          %s1258 = sand.u32 %s196, 1
          %s1259 = scalar_lea.sflag [#allocation4], %s1258
          %s1260 = sand.u32 %s196, 1
          %s1261 = scalar_lea.vmem [#allocation3], %s1260
          %1262 = dma.done %s1259, 16
        $region68: #{_forward_padded.1} parent=63 // pred_fallthru
          _
      $region64: #{_forward_padded.1} parent=5 // pred_fallthru
        _
    $region6: #{_forward_padded.1} parent=1 // loop_footer
      %s20 = sadd.s32 1, %s16
    $region7: #{_forward_padded.1} parent=1 // loop_footer_branch
      %15 = sbr.rel target = $region3
    $region8: #{_forward_padded.1} parent=1 // loop_exit
      _
    %1263 = vsyncpa [#allocation4], 1
    %s1264 = scalar_lea.sflag [#allocation4], 1
    %1265 = vsyncpa %s1264, 1

</llo_original>
